<compile_context>
chip_gen: v7x
topology: tpu7x:2x2x1
jax: 0.10.0
libtpu: 0.0.40
codegen_flags: <defaults>
</compile_context>

<pallas_src>
import functools

import jax
import jax.numpy as jnp
from jax.experimental import pallas as pl
from jax.experimental.pallas import tpu as pltpu


def _round_up(x: int, m: int) -> int:
    return ((x + m - 1) // m) * m


def _cdiv(a: int, b: int) -> int:
    return -(-a // b)


def _tpu_vmem_bytes() -> int:
    """Physical per-core VMEM; conservative (v7x-sized) fallback."""
    try:
        return int(pltpu.get_tpu_info().vmem_capacity_bytes)
    except Exception:
        return 64 * 2 ** 20


def _emd_kernel(pred_ref, gt_ref, tri_ref, seg_ref, out_ref, *, exponent: int):
    # cumsum is linear, so cdf_pred - cdf_gt == cumsum(pred - gt).
    # Inputs stream in their native dtype; upcast to f32 here.
    diff = pred_ref[...].astype(jnp.float32) - gt_ref[...].astype(jnp.float32)

    # Per-sample cumulative sum via block-diagonal upper-triangular matmul
    # (MXU; tri is VMEM-resident across grid steps — constant index_map).
    # NOTE: on v5e the f32 MXU path can become the binding unit; casting
    # tri/seg (exact 0/1-valued) to bf16 is a v5e-specific knob if needed.
    cdf_diff = jnp.dot(diff, tri_ref[...], preferred_element_type=jnp.float32)

    if exponent == 2:
        powed = cdf_diff * cdf_diff                      # |x|^2 == x*x, drop abs
    else:
        powed = jnp.abs(cdf_diff) ** exponent

    # Segment-sum matmul; 1/n_bins is pre-folded into seg, so this is already
    # the per-sample bin mean:  (TILE_R, pack*N) @ (pack*N, pack).
    mean_bins = jnp.dot(powed, seg_ref[...], preferred_element_type=jnp.float32)

    if exponent == 2:
        per_sample = jnp.sqrt(mean_bins)
    else:
        # Padded all-zero samples must contribute exactly 0 (guard against the
        # exp(c*log(0)) lowering of the fractional power).
        per_sample = jnp.where(mean_bins > 0.0,
                               mean_bins ** (1.0 / exponent),
                               jnp.zeros_like(mean_bins))

    # Sublane-only partial reduction; the tiny cross-lane / cross-tile sum and
    # the 1/B normalization are finished in JAX outside the kernel.
    out_ref[...] = jnp.sum(per_sample, axis=0, keepdims=True).reshape(1, 1, -1)


def emd_loss(predictions: jax.Array, ground_truths: jax.Array, exponent: int = 2) -> jax.Array:
    """Pallas TPU implementation of EMDLoss.forward. Returns a scalar."""
    assert predictions.shape == ground_truths.shape
    assert predictions.ndim == 2, "expected (batch, n_bins)"
    B, N = predictions.shape

    # Pack `pack` samples per row so the 128-lane axis is (nearly) full.
    pack = max(1, 128 // N)
    packed_w = pack * N

    # Generation-aware tile cap: 8192 packed rows fits comfortably in 128 MiB
    # VMEM (v5e/v6e); v7x only has 64 MiB, so cap at 4096.
    phys_vmem = _tpu_vmem_bytes()
    max_tile = 8192 if phys_vmem >= 128 * 2 ** 20 else 4096

    # Tile so that total padding is < one tile's worth of rows.
    rows = _cdiv(B, pack)
    num_tiles = max(1, _cdiv(rows, max_tile))
    tile_r = _round_up(_cdiv(rows, num_tiles), 8)
    rows_pad = tile_r * num_tiles
    b_pad = rows_pad * pack

    def _pack_rows(x):
        # Native dtype preserved (kernel upcasts); pad only when actually
        # needed so aligned batches are a free, contiguous reshape.
        if b_pad != B:
            x = jnp.pad(x, ((0, b_pad - B), (0, 0)))
        return x.reshape(rows_pad, packed_w)

    p = _pack_rows(predictions)
    g = _pack_rows(ground_truths)

    # Hoisted, grid-resident matrices:
    #   tri: block-diagonal upper-triangular (per-sample cumsum)
    #   seg: per-sample segment sum with 1/n_bins folded in (bin mean)
    idx = jnp.arange(packed_w, dtype=jnp.int32)
    samp = idx // N
    tri = ((samp[:, None] == samp[None, :]) &
           (idx[:, None] <= idx[None, :])).astype(jnp.float32)
    seg = (samp[:, None] == jnp.arange(pack, dtype=jnp.int32)[None, :]
           ).astype(jnp.float32) * (1.0 / N)

    # Per-step VMEM working-set estimate (double-buffered inputs, resident
    # tri/seg, ~4 f32 intermediates of (tile_r, packed_w)); 2x headroom.
    in_itemsize = jnp.dtype(predictions.dtype).itemsize
    est = (2 * 2 * tile_r * packed_w * in_itemsize
           + 2 * packed_w * (packed_w + pack) * 4
           + 4 * tile_r * packed_w * 4)
    vmem_limit = int(max(32 * 2 ** 20, min(phys_vmem - 16 * 2 ** 20, 2 * est)))

    kernel = functools.partial(_emd_kernel, exponent=exponent)

    partials = pl.pallas_call(
        kernel,
        out_shape=jax.ShapeDtypeStruct((num_tiles, 1, pack), jnp.float32),
        grid_spec=pltpu.PrefetchScalarGridSpec(
            num_scalar_prefetch=0,
            grid=(num_tiles,),
            in_specs=[
                pl.BlockSpec((tile_r, packed_w), lambda i: (i, 0)),    # pred (packed, native dtype)
                pl.BlockSpec((tile_r, packed_w), lambda i: (i, 0)),    # gt   (packed, native dtype)
                pl.BlockSpec((packed_w, packed_w), lambda i: (0, 0)),  # tri  (resident)
                pl.BlockSpec((packed_w, pack), lambda i: (0, 0)),      # seg  (resident)
            ],
            out_specs=pl.BlockSpec((1, 1, pack), lambda i: (i, 0, 0)),  # per-tile partials
        ),
        compiler_params=pltpu.CompilerParams(
            dimension_semantics=("parallel",),    # tiles are independent → megacore on v7x
            vmem_limit_bytes=vmem_limit,
        ),
    )(p, g, tri, seg)

    # Padded samples contribute exactly zero; normalize by the true batch size.
    return jnp.sum(partials) / B


def _emd_loss_ref(predictions, ground_truths, exponent: int = 2):
    """Pure-JAX reference mirroring the PyTorch module."""
    pred_cdf = jnp.cumsum(predictions, axis=1)
    gt_cdf = jnp.cumsum(ground_truths, axis=1)
    loss = jnp.mean(jnp.abs(gt_cdf - pred_cdf) ** exponent, axis=1) ** (1.0 / exponent)
    return jnp.mean(loss)


if __name__ == "__main__":
    key = jax.random.PRNGKey(0)

    # Test 1: NIMA-style 16-bin distributions, exponent=2 (packs 8 samples/row).
    B, N_BINS = 8, 16
    k_pred, k_gt, key = jax.random.split(key, 3)
    predictions = jax.nn.softmax(jax.random.normal(k_pred, (B, N_BINS), jnp.float32), axis=-1)
    ground_truths = jax.nn.softmax(jax.random.normal(k_gt, (B, N_BINS), jnp.float32), axis=-1)

    out = jax.block_until_ready(emd_loss(predictions, ground_truths, exponent=2))
    ref = _emd_loss_ref(predictions, ground_truths, exponent=2)
    assert jnp.allclose(out, ref, atol=1e-5, rtol=1e-4), (out, ref)

    # Test 2: non-divisible batch (padding path), non-128 packed width, exponent=3.
    B2, N2 = 5, 10
    k_pred2, k_gt2, key = jax.random.split(key, 3)
    pred2 = jax.nn.softmax(jax.random.normal(k_pred2, (B2, N2), jnp.float32), axis=-1)
    gt2 = jax.nn.softmax(jax.random.normal(k_gt2, (B2, N2), jnp.float32), axis=-1)

    out2 = jax.block_until_ready(emd_loss(pred2, gt2, exponent=3))
    ref2 = _emd_loss_ref(pred2, gt2, exponent=3)
    assert jnp.allclose(out2, ref2, atol=1e-5, rtol=1e-4), (out2, ref2)

    print("KERNEL_OK")
</pallas_src>

<mosaic_0001>
module attributes {stable_mosaic.version = 11 : i64} {
  func.func @_emd_kernel(%arg0: i32, %arg1: memref<8x128xf32, #tpu.memory_space<vmem>>, %arg2: memref<8x128xf32, #tpu.memory_space<vmem>>, %arg3: memref<128x128xf32, #tpu.memory_space<vmem>>, %arg4: memref<128x8xf32, #tpu.memory_space<vmem>>, %arg5: memref<1x1x8xf32, #tpu.memory_space<vmem>>) attributes {dimension_semantics = [#tpu.dimension_semantics<parallel>], iteration_bounds = array<i64: 1>, scalar_prefetch = 0 : i64, scratch_operands = 0 : i64, tpu.core_type = #tpu.core_type<tc>, window_params = [{transform_indices = @transform_0, window_bounds = array<i64: 8, 128>}, {transform_indices = @transform_1, window_bounds = array<i64: 8, 128>}, {pipeline_mode = #tpu.pipeline_mode<synchronous>, transform_indices = @transform_2, window_bounds = array<i64: 128, 128>}, {pipeline_mode = #tpu.pipeline_mode<synchronous>, transform_indices = @transform_3, window_bounds = array<i64: 128, 8>}, {transform_indices = @transform_4, window_bounds = array<i64: 1, 1, 8>}]} {
    %c0 = arith.constant 0 : index
    %c0_0 = arith.constant 0 : index
    %0 = vector.load %arg1[%c0, %c0_0] : memref<8x128xf32, #tpu.memory_space<vmem>>, vector<8x128xf32>
    %c0_1 = arith.constant 0 : index
    %c0_2 = arith.constant 0 : index
    %1 = vector.load %arg2[%c0_1, %c0_2] : memref<8x128xf32, #tpu.memory_space<vmem>>, vector<8x128xf32>
    %2 = arith.subf %0, %1 : vector<8x128xf32>
    %c0_3 = arith.constant 0 : index
    %c0_4 = arith.constant 0 : index
    %3 = vector.load %arg3[%c0_3, %c0_4] : memref<128x128xf32, #tpu.memory_space<vmem>>, vector<128x128xf32>
    %cst = arith.constant dense<0.000000e+00> : vector<8x128xf32>
    %4 = tpu.matmul %2, %3, %cst {dimension_numbers = #tpu.dot_dimension_numbers<[1], [0], [0], [1], [0, 0, 1, 1], [], []>} : vector<8x128xf32>, vector<128x128xf32>, vector<8x128xf32> -> vector<8x128xf32>
    %5 = arith.mulf %4, %4 : vector<8x128xf32>
    %c0_5 = arith.constant 0 : index
    %c0_6 = arith.constant 0 : index
    %6 = vector.load %arg4[%c0_5, %c0_6] : memref<128x8xf32, #tpu.memory_space<vmem>>, vector<128x8xf32>
    %cst_7 = arith.constant dense<0.000000e+00> : vector<8x8xf32>
    %7 = tpu.matmul %5, %6, %cst_7 {dimension_numbers = #tpu.dot_dimension_numbers<[1], [0], [0], [1], [0, 0, 1, 1], [], []>} : vector<8x128xf32>, vector<128x8xf32>, vector<8x8xf32> -> vector<8x8xf32>
    %8 = math.sqrt %7 : vector<8x8xf32>
    %cst_8 = arith.constant dense<0.000000e+00> : vector<8xf32>
    %9 = vector.multi_reduction <add>, %8, %cst_8 [0] : vector<8x8xf32> to vector<8xf32>
    %10 = vector.shape_cast %9 : vector<8xf32> to vector<1x8xf32>
    %11 = vector.shape_cast %10 : vector<1x8xf32> to vector<1x1x8xf32>
    %c0_9 = arith.constant 0 : index
    %c0_10 = arith.constant 0 : index
    %c0_11 = arith.constant 0 : index
    %12 = vector.load %arg5[%c0_9, %c0_10, %c0_11] : memref<1x1x8xf32, #tpu.memory_space<vmem>>, vector<1x1x8xf32>
    tpu.vector_store %arg5[%c0_9, %c0_10, %c0_11], %11 {strides = array<i32>} : memref<1x1x8xf32, #tpu.memory_space<vmem>>, vector<1x1x8xf32>,
    return
  }
  func.func @transform_0(%arg0: i32) -> (i32, i32) {
    %c0_i32 = arith.constant 0 : i32
    %c0_i32_0 = arith.constant 0 : i32
    return %arg0, %c0_i32 : i32, i32
  }
  func.func @transform_1(%arg0: i32) -> (i32, i32) {
    %c0_i32 = arith.constant 0 : i32
    %c0_i32_0 = arith.constant 0 : i32
    return %arg0, %c0_i32 : i32, i32
  }
  func.func @transform_2(%arg0: i32) -> (i32, i32) {
    %c0_i32 = arith.constant 0 : i32
    %c0_i32_0 = arith.constant 0 : i32
    %c0_i32_1 = arith.constant 0 : i32
    return %c0_i32, %c0_i32_0 : i32, i32
  }
  func.func @transform_3(%arg0: i32) -> (i32, i32) {
    %c0_i32 = arith.constant 0 : i32
    %c0_i32_0 = arith.constant 0 : i32
    %c0_i32_1 = arith.constant 0 : i32
    return %c0_i32, %c0_i32_0 : i32, i32
  }
  func.func @transform_4(%arg0: i32) -> (i32, i32, i32) {
    %c0_i32 = arith.constant 0 : i32
    %c0_i32_0 = arith.constant 0 : i32
    %c0_i32_1 = arith.constant 0 : i32
    return %arg0, %c0_i32, %c0_i32_0 : i32, i32, i32
  }
}

</mosaic_0001>

<llo_original>
// kernel: tpu_custom_call.1
$region0: #{tpu_custom_call.1}
  #allocation0 [shape = 'u32[]', space=smem, size = 0x4, offset = 0x4, fixed_abs, tag = 'smem constant byte address 0x4 - core index']
  #allocation1 [shape = 'u32[144,128]{1,0:T(1,128)}', space=vmem, size = 0x12000, scoped, tag = 'internal scratch']
  %s0 = inlined_call_operand.vmem [shape: f32[8,128], index: 0, kind: input, shape index: {}]
  %s1 = inlined_call_operand.hbm [shape: f32[8,128], index: 1, kind: input, shape index: {}]
  %s2 = inlined_call_operand.vmem [shape: f32[128,128], index: 2, kind: input, shape index: {}]
  %s3 = inlined_call_operand.vmem [shape: f32[128,8], index: 3, kind: input, shape index: {}]
  %s4 = inlined_call_operand.hbm [shape: f32[1,1,8], index: 4, kind: output, shape index: {}]
  %s5 = sld [smem:[#allocation0]]
  $region30: #{tpu_custom_call.1} parent=0
    _
  %s7 = ssub.s32 1, %s5
  %s8 = scalar_select 0, %s7, %s5
  $region1: #{tpu_custom_call.1} parent=0
    #allocation2 [shape = 'u8[4096]{0}', space=vmem, size = 0x1000, scoped, tag = 'input window, operand 1, single buffered']
    #allocation3 [shape = 's32[1]{0}', space=sflag, size = 0x4, scoped, tag = 'scoped memory for tpu_custom_call.1']
    #allocation4 [shape = 's32[1]{0}', space=sflag, size = 0x4, scoped, tag = 'scoped memory for tpu_custom_call.1']
    #allocation5 [shape = 'u8[512]{0}', space=vmem, size = 0x400, scoped, tag = 'output window, operand 0, single buffered']
    %9 = vsyncpa [#allocation3], 0
    %10 = vsyncpa [#allocation4], 0
    // Predicated region
    $region2: #{tpu_custom_call.1} parent=1 // pred_check
      _
    $region3: #{tpu_custom_call.1} parent=1 // pred_check_branch
      %12 = sbr.rel (0) target = $region5
    $region4: #{tpu_custom_call.1} parent=1 // pred_region
      _
    $region5: #{tpu_custom_call.1} parent=1 // pred_fallthru
      _
    // Predicated region
    $region6: #{tpu_custom_call.1} parent=1 // pred_check
      _
    $region7: #{tpu_custom_call.1} parent=1 // pred_check_branch
      %14 = sbr.rel (0) target = $region9
    $region8: #{tpu_custom_call.1} parent=1 // pred_region
      %s16 = ssub.s32 128, 128
      %17 = vsyncadd [#allocation3], %s16
      %s19 = sshll.u32 [#allocation2], 4
      %s20 = int_to_ptr.vmem [resolvable:$true] %s19
      %22 = dma.hbm_to_vmem [thread:$0]  %s1, 128, %s20, [#allocation3]
    $region9: #{tpu_custom_call.1} parent=1 // pred_fallthru
      _
    // Predicated region
    $region10: #{tpu_custom_call.1} parent=1 // pred_check
      _
    $region11: #{tpu_custom_call.1} parent=1 // pred_check_branch
      %24 = sbr.rel (0) target = $region13
    $region12: #{tpu_custom_call.1} parent=1 // pred_region
      _
    $region13: #{tpu_custom_call.1} parent=1 // pred_fallthru
      _
    // Predicated region
    $region14: #{tpu_custom_call.1} parent=1 // pred_check
      _
    $region15: #{tpu_custom_call.1} parent=1 // pred_check_branch
      %26 = sbr.rel (0) target = $region17
    $region16: #{tpu_custom_call.1} parent=1 // pred_region
      _
    $region17: #{tpu_custom_call.1} parent=1 // pred_fallthru
      _
    // Predicated region
    $region18: #{tpu_custom_call.1} parent=1 // pred_check
      _
    $region19: #{tpu_custom_call.1} parent=1 // pred_check_branch
      %28 = sbr.rel (0) target = $region21
    $region20: #{tpu_custom_call.1} parent=1 // pred_region
      %29 = dma.done [#allocation3], 128
    $region21: #{tpu_custom_call.1} parent=1 // pred_fallthru
      _
    %v30 = vld [vmem:[%s0] sm:$0xff]
    %v31 = vld [vmem:[#allocation2] sm:$0xff]
    %v32 = vsub.f32 %v30, %v31
    %v33 = vld [vmem:[%s2] sm:$0xff]
    %v34 = vld [vmem:[%s2 + $0x8] sm:$0xff]
    %v35 = vld [vmem:[%s2 + $0x10] sm:$0xff]
    %v36 = vld [vmem:[%s2 + $0x18] sm:$0xff]
    %v37 = vld [vmem:[%s2 + $0x20] sm:$0xff]
    %v38 = vld [vmem:[%s2 + $0x28] sm:$0xff]
    %v39 = vld [vmem:[%s2 + $0x30] sm:$0xff]
    %v40 = vld [vmem:[%s2 + $0x38] sm:$0xff]
    %v41 = vld [vmem:[%s2 + $0x40] sm:$0xff]
    %v42 = vld [vmem:[%s2 + $0x48] sm:$0xff]
    %v43 = vld [vmem:[%s2 + $0x50] sm:$0xff]
    %v44 = vld [vmem:[%s2 + $0x58] sm:$0xff]
    %v45 = vld [vmem:[%s2 + $0x60] sm:$0xff]
    %v46 = vld [vmem:[%s2 + $0x68] sm:$0xff]
    %v47 = vld [vmem:[%s2 + $0x70] sm:$0xff]
    %v48 = vld [vmem:[%s2 + $0x78] sm:$0xff]
    %49 = vmatprep.subr.mxu0 0.0
    %50 = vmatpush1.msra.mxu0 %v33
    %51 = vmatprep.subr.mxu0 0.0
    %52 = vmatpush1.msra.mxu0 %v34
    %53 = vmatprep.subr.mxu0 0.0
    %54 = vmatpush1.msra.mxu0 %v35
    %55 = vmatprep.subr.mxu0 0.0
    %56 = vmatpush1.msra.mxu0 %v36
    %57 = vmatprep.subr.mxu0 0.0
    %58 = vmatpush1.msra.mxu0 %v37
    %59 = vmatprep.subr.mxu0 0.0
    %60 = vmatpush1.msra.mxu0 %v38
    %61 = vmatprep.subr.mxu0 0.0
    %62 = vmatpush1.msra.mxu0 %v39
    %63 = vmatprep.subr.mxu0 0.0
    %64 = vmatpush1.msra.mxu0 %v40
    %65 = vmatprep.subr.mxu0 0.0
    %66 = vmatpush1.msra.mxu0 %v41
    %67 = vmatprep.subr.mxu0 0.0
    %68 = vmatpush1.msra.mxu0 %v42
    %69 = vmatprep.subr.mxu0 0.0
    %70 = vmatpush1.msra.mxu0 %v43
    %71 = vmatprep.subr.mxu0 0.0
    %72 = vmatpush1.msra.mxu0 %v44
    %73 = vmatprep.subr.mxu0 0.0
    %74 = vmatpush1.msra.mxu0 %v45
    %75 = vmatprep.subr.mxu0 0.0
    %76 = vmatpush1.msra.mxu0 %v46
    %77 = vmatprep.subr.mxu0 0.0
    %78 = vmatpush1.msra.mxu0 %v47
    %79 = vmatprep.subr.mxu0 0.0
    %80 = vmatpush1.msra.mxu0 %v48
    %81 = vmatprep.subr.mxu0 0.0
    %82 = vmatpush1.msra.mxu0 0.0
    %83 = vmatprep.subr.mxu0 0.0
    %84 = vmatpush1.msra.mxu0 0.0
    %85 = vmatprep.subr.mxu0 0.0
    %86 = vmatpush1.msra.mxu0 0.0
    %87 = vmatprep.subr.mxu0 0.0
    %88 = vmatpush1.msra.mxu0 0.0
    %89 = vmatprep.subr.mxu0 0.0
    %90 = vmatpush1.msra.mxu0 0.0
    %91 = vmatprep.subr.mxu0 0.0
    %92 = vmatpush1.msra.mxu0 0.0
    %93 = vmatprep.subr.mxu0 0.0
    %94 = vmatpush1.msra.mxu0 0.0
    %95 = vmatprep.subr.mxu0 0.0
    %96 = vmatpush1.msra.mxu0 0.0
    %97 = vmatprep.subr.mxu0 0.0
    %98 = vmatpush1.msra.mxu0 0.0
    %99 = vmatprep.subr.mxu0 0.0
    %100 = vmatpush1.msra.mxu0 0.0
    %101 = vmatprep.subr.mxu0 0.0
    %102 = vmatpush1.msra.mxu0 0.0
    %103 = vmatprep.subr.mxu0 0.0
    %104 = vmatpush1.msra.mxu0 0.0
    %105 = vmatprep.subr.mxu0 0.0
    %106 = vmatpush1.msra.mxu0 0.0
    %107 = vmatprep.subr.mxu0 0.0
    %108 = vmatpush1.msra.mxu0 0.0
    %109 = vmatprep.subr.mxu0 0.0
    %110 = vmatpush1.msra.mxu0 0.0
    %111 = vmatprep.subr.mxu0 0.0
    %112 = vmatpush1.msra.mxu0 0.0
    %113 = vmatprep.mubr.f32.mxu0 0.0
    %114 = vmatmul.mubr.f32.gmra.mrb[0].mxu0 %v32
    %v115 = vpop.f32.mrb[0].mxu0
    %v116 = vadd.f32 0.0, %v115
    %v117 = vpop.f32.mrb[0].mxu0
    %118 = vdwg.mxu0
    %v119 = vmul.f32 %v116, %v116
    %v120 = vld [vmem:[%s3] sm:$0xff]
    %v121 = vld [vmem:[%s3 + $0x8] sm:$0xff]
    %v122 = vld [vmem:[%s3 + $0x10] sm:$0xff]
    %v123 = vld [vmem:[%s3 + $0x18] sm:$0xff]
    %v124 = vld [vmem:[%s3 + $0x20] sm:$0xff]
    %v125 = vld [vmem:[%s3 + $0x28] sm:$0xff]
    %v126 = vld [vmem:[%s3 + $0x30] sm:$0xff]
    %v127 = vld [vmem:[%s3 + $0x38] sm:$0xff]
    %v128 = vld [vmem:[%s3 + $0x40] sm:$0xff]
    %v129 = vld [vmem:[%s3 + $0x48] sm:$0xff]
    %v130 = vld [vmem:[%s3 + $0x50] sm:$0xff]
    %v131 = vld [vmem:[%s3 + $0x58] sm:$0xff]
    %v132 = vld [vmem:[%s3 + $0x60] sm:$0xff]
    %v133 = vld [vmem:[%s3 + $0x68] sm:$0xff]
    %v134 = vld [vmem:[%s3 + $0x70] sm:$0xff]
    %v135 = vld [vmem:[%s3 + $0x78] sm:$0xff]
    %136 = vmatprep.subr.mxu0 0.0
    %137 = vmatpush1.msra.mxu0 %v120
    %138 = vmatprep.subr.mxu0 0.0
    %139 = vmatpush1.msra.mxu0 %v121
    %140 = vmatprep.subr.mxu0 0.0
    %141 = vmatpush1.msra.mxu0 %v122
    %142 = vmatprep.subr.mxu0 0.0
    %143 = vmatpush1.msra.mxu0 %v123
    %144 = vmatprep.subr.mxu0 0.0
    %145 = vmatpush1.msra.mxu0 %v124
    %146 = vmatprep.subr.mxu0 0.0
    %147 = vmatpush1.msra.mxu0 %v125
    %148 = vmatprep.subr.mxu0 0.0
    %149 = vmatpush1.msra.mxu0 %v126
    %150 = vmatprep.subr.mxu0 0.0
    %151 = vmatpush1.msra.mxu0 %v127
    %152 = vmatprep.subr.mxu0 0.0
    %153 = vmatpush1.msra.mxu0 %v128
    %154 = vmatprep.subr.mxu0 0.0
    %155 = vmatpush1.msra.mxu0 %v129
    %156 = vmatprep.subr.mxu0 0.0
    %157 = vmatpush1.msra.mxu0 %v130
    %158 = vmatprep.subr.mxu0 0.0
    %159 = vmatpush1.msra.mxu0 %v131
    %160 = vmatprep.subr.mxu0 0.0
    %161 = vmatpush1.msra.mxu0 %v132
    %162 = vmatprep.subr.mxu0 0.0
    %163 = vmatpush1.msra.mxu0 %v133
    %164 = vmatprep.subr.mxu0 0.0
    %165 = vmatpush1.msra.mxu0 %v134
    %166 = vmatprep.subr.mxu0 0.0
    %167 = vmatpush1.msra.mxu0 %v135
    %168 = vmatprep.subr.mxu0 0.0
    %169 = vmatpush1.msra.mxu0 0.0
    %170 = vmatprep.subr.mxu0 0.0
    %171 = vmatpush1.msra.mxu0 0.0
    %172 = vmatprep.subr.mxu0 0.0
    %173 = vmatpush1.msra.mxu0 0.0
    %174 = vmatprep.subr.mxu0 0.0
    %175 = vmatpush1.msra.mxu0 0.0
    %176 = vmatprep.subr.mxu0 0.0
    %177 = vmatpush1.msra.mxu0 0.0
    %178 = vmatprep.subr.mxu0 0.0
    %179 = vmatpush1.msra.mxu0 0.0
    %180 = vmatprep.subr.mxu0 0.0
    %181 = vmatpush1.msra.mxu0 0.0
    %182 = vmatprep.subr.mxu0 0.0
    %183 = vmatpush1.msra.mxu0 0.0
    %184 = vmatprep.subr.mxu0 0.0
    %185 = vmatpush1.msra.mxu0 0.0
    %186 = vmatprep.subr.mxu0 0.0
    %187 = vmatpush1.msra.mxu0 0.0
    %188 = vmatprep.subr.mxu0 0.0
    %189 = vmatpush1.msra.mxu0 0.0
    %190 = vmatprep.subr.mxu0 0.0
    %191 = vmatpush1.msra.mxu0 0.0
    %192 = vmatprep.subr.mxu0 0.0
    %193 = vmatpush1.msra.mxu0 0.0
    %194 = vmatprep.subr.mxu0 0.0
    %195 = vmatpush1.msra.mxu0 0.0
    %196 = vmatprep.subr.mxu0 0.0
    %197 = vmatpush1.msra.mxu0 0.0
    %198 = vmatprep.subr.mxu0 0.0
    %199 = vmatpush1.msra.mxu0 0.0
    %200 = vmatprep.mubr.f32.mxu0 0.0
    %201 = vmatmul.mubr.f32.gmra.mrb[0].mxu0 %v119
    %v202 = vpop.f32.mrb[0].mxu0
    %v203 = vadd.f32 0.0, %v202
    %v204 = vpop.f32.mrb[0].mxu0
    %205 = vdwg.mxu0
    %v206 = vrsqrt.pop %v203
    %v207 = vmul.f32 %v203, %v206
    %vm208 = vcmp.eq.f32.partialorder %v203, inf
    %v209 = vsel %vm208, %v203, %v207
    %vm210 = vcmp.eq.f32.partialorder %v203, 0.0
    %v211 = vand.u32 %v203, 2147483648
    %v212 = vsel %vm210, %v211, %v209
    %vm213 = vcmask 64512
    %v214 = vsel %vm213, %v212, 0.0
    %v215 = vrot.slane %v214, 4
    %v216 = vadd.f32 %v214, %v215
    %v217 = vrot.slane %v216, 2
    %v218 = vadd.f32 %v216, %v217
    %v219 = vrot.slane %v218, 1
    %v220 = vadd.f32 %v218, %v219
    %vm221 = vcmask 57344
    %222 = vst.msk [vmem:[#allocation5] sm:$0x1] %vm221, %v220
    // Predicated region
    $region22: #{tpu_custom_call.1} parent=1 // pred_check
      _
    $region23: #{tpu_custom_call.1} parent=1 // pred_check_branch
      %224 = sbr.rel (0) target = $region25
    $region24: #{tpu_custom_call.1} parent=1 // pred_region
      %s226 = ssub.s32 16, 16
      %227 = vsyncadd [#allocation4], %s226
      %s229 = sshll.u32 [#allocation5], 4
      %s230 = int_to_ptr.vmem [resolvable:$true] %s229
      %232 = dma.vmem_to_hbm [thread:$0]  %s230, 16, %s4, [#allocation4]
    $region25: #{tpu_custom_call.1} parent=1 // pred_fallthru
      _
    // Predicated region
    $region26: #{tpu_custom_call.1} parent=1 // pred_check
      _
    $region27: #{tpu_custom_call.1} parent=1 // pred_check_branch
      %234 = sbr.rel (0) target = $region29
    $region28: #{tpu_custom_call.1} parent=1 // pred_region
      %235 = dma.done [#allocation4], 16
    $region29: #{tpu_custom_call.1} parent=1 // pred_fallthru
      _
    %236 = vsyncpa [#allocation3], 1
    %237 = vsyncpa [#allocation4], 1

</llo_original>
